<compile_context>
chip_gen: v7x
topology: tpu7x:2x2x1
jax: 0.10.0
libtpu: 0.0.40
codegen_flags: <defaults>
</compile_context>

<pallas_src>
import jax
import jax.numpy as jnp
from jax.experimental import pallas as pl
from jax.experimental.pallas import tpu as pltpu


def _round_up(x, m):
    return (x + m - 1) // m * m


def dnn_kernel(x_ref,
               w1_ref, b1_ref,
               w2_ref, b2_ref,
               w3_ref, b3_ref,
               w4_ref, b4_ref,
               o_ref):
    """Whole-MLP forward on one batch tile: 3x (Linear + ReLU) + final Linear.

    x/weights are bf16, accumulation is f32; bias add + ReLU in f32.
    """
    x = x_ref[...]

    # Layer 1: Linear(input_dim, hidden_dim) + ReLU
    h = jnp.dot(x, w1_ref[...], preferred_element_type=jnp.float32) + b1_ref[...]
    h = jnp.maximum(h, 0.0)

    # Layer 2: Linear(hidden_dim, hidden_dim) + ReLU
    h = jnp.dot(h.astype(w2_ref.dtype), w2_ref[...],
                preferred_element_type=jnp.float32) + b2_ref[...]
    h = jnp.maximum(h, 0.0)

    # Layer 3: Linear(hidden_dim, hidden_dim) + ReLU
    h = jnp.dot(h.astype(w3_ref.dtype), w3_ref[...],
                preferred_element_type=jnp.float32) + b3_ref[...]
    h = jnp.maximum(h, 0.0)

    # Layer 4: Linear(hidden_dim, output_dim), no activation.
    out = jnp.dot(h.astype(w4_ref.dtype), w4_ref[...],
                  preferred_element_type=jnp.float32) + b4_ref[...]

    o_ref[...] = out.astype(o_ref.dtype)


def dnn_forward(x, params, *, batch_tile=128):
    """x: [B, C, H, W] float32 (NCHW). params: dict of [in,out] weights, [1,out] biases."""
    B = x.shape[0]
    x_flat = x.reshape(B, -1).astype(jnp.float32)  # matches torch x.view(batch_size, -1)
    input_dim = x_flat.shape[1]

    w1, b1 = params["w1"], params["b1"]
    w2, b2 = params["w2"], params["b2"]
    w3, b3 = params["w3"], params["b3"]
    w4, b4 = params["w4"], params["b4"]

    hidden_dim = w1.shape[1]
    output_dim = w4.shape[1]

    # TPU-friendly padded dims: lanes -> multiples of 128, batch -> multiple of 8.
    in_p = _round_up(input_dim, 128)
    hid_p = _round_up(hidden_dim, 128)
    out_p = _round_up(output_dim, 128)

    tb = min(batch_tile, _round_up(B, 8))   # batch tile (multiple of 8)
    b_p = _round_up(B, tb)                  # padded batch, divisible by tb

    def pad2(a, rows, cols):
        return jnp.pad(a, ((0, rows - a.shape[0]), (0, cols - a.shape[1])))

    # Zero padding is exact for this MLP (zero weights contribute 0, relu(0)=0).
    x_p = pad2(x_flat, b_p, in_p).astype(jnp.bfloat16)
    w1_p = pad2(w1, in_p, hid_p).astype(jnp.bfloat16)
    w2_p = pad2(w2, hid_p, hid_p).astype(jnp.bfloat16)
    w3_p = pad2(w3, hid_p, hid_p).astype(jnp.bfloat16)
    w4_p = pad2(w4, hid_p, out_p).astype(jnp.bfloat16)
    b1_p = pad2(b1, 1, hid_p).astype(jnp.float32)
    b2_p = pad2(b2, 1, hid_p).astype(jnp.float32)
    b3_p = pad2(b3, 1, hid_p).astype(jnp.float32)
    b4_p = pad2(b4, 1, out_p).astype(jnp.float32)

    grid = (b_p // tb,)

    def resident(shape):
        # Same block index every iteration -> weight/bias stays VMEM-resident.
        return pl.BlockSpec(shape, lambda i: (0, 0))

    flops = 2 * b_p * (in_p * hid_p + 2 * hid_p * hid_p + hid_p * out_p)
    bytes_accessed = (
        x_p.size * 2
        + (w1_p.size + w2_p.size + w3_p.size + w4_p.size) * 2
        + (b1_p.size + b2_p.size + b3_p.size + b4_p.size) * 4
        + b_p * out_p * 4
    )

    out = pl.pallas_call(
        dnn_kernel,
        out_shape=jax.ShapeDtypeStruct((b_p, out_p), jnp.float32),
        grid=grid,
        in_specs=[
            pl.BlockSpec((tb, in_p), lambda i: (i, 0)),     # x: tiled over batch
            resident((in_p, hid_p)), resident((1, hid_p)),  # w1, b1
            resident((hid_p, hid_p)), resident((1, hid_p)),  # w2, b2
            resident((hid_p, hid_p)), resident((1, hid_p)),  # w3, b3
            resident((hid_p, out_p)), resident((1, out_p)),  # w4, b4
        ],
        out_specs=pl.BlockSpec((tb, out_p), lambda i: (i, 0)),
        compiler_params=pltpu.CompilerParams(
            dimension_semantics=("parallel",)),
        cost_estimate=pl.CostEstimate(
            flops=flops, transcendentals=0, bytes_accessed=bytes_accessed),
    )(x_p, w1_p, b1_p, w2_p, b2_p, w3_p, b3_p, w4_p, b4_p)

    return out[:B, :output_dim]


def init_params(key, input_dim, hidden_dim, output_dim):
    """Deterministic synthetic params (PyTorch-style uniform init). Weights stored [in, out]."""
    ks = jax.random.split(key, 8)

    def lin(kw, kb, fan_in, fan_out):
        bound = 1.0 / jnp.sqrt(fan_in)
        w = jax.random.uniform(kw, (fan_in, fan_out), jnp.float32, -bound, bound)
        b = jax.random.uniform(kb, (1, fan_out), jnp.float32, -bound, bound)
        return w, b

    w1, b1 = lin(ks[0], ks[1], input_dim, hidden_dim)
    w2, b2 = lin(ks[2], ks[3], hidden_dim, hidden_dim)
    w3, b3 = lin(ks[4], ks[5], hidden_dim, hidden_dim)
    w4, b4 = lin(ks[6], ks[7], hidden_dim, output_dim)
    return dict(w1=w1, b1=b1, w2=w2, b2=b2, w3=w3, b3=b3, w4=w4, b4=b4)


def _ref_forward(x, params):
    """Pure-JAX reference with the same bf16-input / f32-accumulate math."""
    xf = x.reshape(x.shape[0], -1)

    def lin(h, w, b):
        hb = h.astype(jnp.bfloat16).astype(jnp.float32)
        wb = w.astype(jnp.bfloat16).astype(jnp.float32)
        return jnp.dot(hb, wb) + b

    h = jnp.maximum(lin(xf, params["w1"], params["b1"]), 0.0)
    h = jnp.maximum(lin(h, params["w2"], params["b2"]), 0.0)
    h = jnp.maximum(lin(h, params["w3"], params["b3"]), 0.0)
    return lin(h, params["w4"], params["b4"])


if __name__ == "__main__":
    key = jax.random.PRNGKey(0)
    k_x, k_p = jax.random.split(key)

    # Small CIFAR-like input: batch=2, channels=4, spatial=16x16.
    B, C, H, W = 2, 4, 16, 16
    input_dim = C * H * W          # 1024
    hidden_dim = 32
    output_dim = 10

    x = jax.random.normal(k_x, (B, C, H, W), dtype=jnp.float32)
    params = init_params(k_p, input_dim, hidden_dim, output_dim)

    out = dnn_forward(x, params)
    out = jax.block_until_ready(out)

    ref = _ref_forward(x, params)
    assert out.shape == (B, output_dim)
    assert jnp.allclose(out, ref, atol=1e-2, rtol=1e-2), float(jnp.max(jnp.abs(out - ref)))

    print("KERNEL_OK")
</pallas_src>

<mosaic_0001>
module attributes {stable_mosaic.version = 11 : i64} {
  func.func @dnn_kernel(%arg0: i32, %arg1: memref<8x1024xbf16, #tpu.memory_space<vmem>>, %arg2: memref<1024x128xbf16, #tpu.memory_space<vmem>>, %arg3: memref<1x128xf32, #tpu.memory_space<vmem>>, %arg4: memref<128x128xbf16, #tpu.memory_space<vmem>>, %arg5: memref<1x128xf32, #tpu.memory_space<vmem>>, %arg6: memref<128x128xbf16, #tpu.memory_space<vmem>>, %arg7: memref<1x128xf32, #tpu.memory_space<vmem>>, %arg8: memref<128x128xbf16, #tpu.memory_space<vmem>>, %arg9: memref<1x128xf32, #tpu.memory_space<vmem>>, %arg10: memref<8x128xf32, #tpu.memory_space<vmem>>) attributes {dimension_semantics = [#tpu.dimension_semantics<parallel>], iteration_bounds = array<i64: 1>, scalar_prefetch = 0 : i64, scratch_operands = 0 : i64, tpu.core_type = #tpu.core_type<tc>, window_params = [{transform_indices = @transform_0, window_bounds = array<i64: 8, 1024>}, {pipeline_mode = #tpu.pipeline_mode<synchronous>, transform_indices = @transform_1, window_bounds = array<i64: 1024, 128>}, {pipeline_mode = #tpu.pipeline_mode<synchronous>, transform_indices = @transform_2, window_bounds = array<i64: 1, 128>}, {pipeline_mode = #tpu.pipeline_mode<synchronous>, transform_indices = @transform_3, window_bounds = array<i64: 128, 128>}, {pipeline_mode = #tpu.pipeline_mode<synchronous>, transform_indices = @transform_4, window_bounds = array<i64: 1, 128>}, {pipeline_mode = #tpu.pipeline_mode<synchronous>, transform_indices = @transform_5, window_bounds = array<i64: 128, 128>}, {pipeline_mode = #tpu.pipeline_mode<synchronous>, transform_indices = @transform_6, window_bounds = array<i64: 1, 128>}, {pipeline_mode = #tpu.pipeline_mode<synchronous>, transform_indices = @transform_7, window_bounds = array<i64: 128, 128>}, {pipeline_mode = #tpu.pipeline_mode<synchronous>, transform_indices = @transform_8, window_bounds = array<i64: 1, 128>}, {transform_indices = @transform_9, window_bounds = array<i64: 8, 128>}]} {
    %c0 = arith.constant 0 : index
    %c0_0 = arith.constant 0 : index
    %0 = vector.load %arg1[%c0, %c0_0] : memref<8x1024xbf16, #tpu.memory_space<vmem>>, vector<8x1024xbf16>
    %c0_1 = arith.constant 0 : index
    %c0_2 = arith.constant 0 : index
    %1 = vector.load %arg2[%c0_1, %c0_2] : memref<1024x128xbf16, #tpu.memory_space<vmem>>, vector<1024x128xbf16>
    %cst = arith.constant dense<0.000000e+00> : vector<8x128xf32>
    %2 = tpu.matmul %0, %1, %cst {dimension_numbers = #tpu.dot_dimension_numbers<[1], [0], [0], [1], [0, 0, 1, 1], [], []>} : vector<8x1024xbf16>, vector<1024x128xbf16>, vector<8x128xf32> -> vector<8x128xf32>
    %c0_3 = arith.constant 0 : index
    %c0_4 = arith.constant 0 : index
    %3 = vector.load %arg3[%c0_3, %c0_4] : memref<1x128xf32, #tpu.memory_space<vmem>>, vector<1x128xf32>
    %4 = vector.broadcast %3 : vector<1x128xf32> to vector<8x128xf32>
    %5 = arith.addf %2, %4 : vector<8x128xf32>
    %cst_5 = arith.constant 0.000000e+00 : f32
    %6 = vector.broadcast %cst_5 : f32 to vector<8x128xf32>
    %7 = arith.maximumf %5, %6 : vector<8x128xf32>
    %8 = arith.truncf %7 : vector<8x128xf32> to vector<8x128xbf16>
    %c0_6 = arith.constant 0 : index
    %c0_7 = arith.constant 0 : index
    %9 = vector.load %arg4[%c0_6, %c0_7] : memref<128x128xbf16, #tpu.memory_space<vmem>>, vector<128x128xbf16>
    %cst_8 = arith.constant dense<0.000000e+00> : vector<8x128xf32>
    %10 = tpu.matmul %8, %9, %cst_8 {dimension_numbers = #tpu.dot_dimension_numbers<[1], [0], [0], [1], [0, 0, 1, 1], [], []>} : vector<8x128xbf16>, vector<128x128xbf16>, vector<8x128xf32> -> vector<8x128xf32>
    %c0_9 = arith.constant 0 : index
    %c0_10 = arith.constant 0 : index
    %11 = vector.load %arg5[%c0_9, %c0_10] : memref<1x128xf32, #tpu.memory_space<vmem>>, vector<1x128xf32>
    %12 = vector.broadcast %11 : vector<1x128xf32> to vector<8x128xf32>
    %13 = arith.addf %10, %12 : vector<8x128xf32>
    %cst_11 = arith.constant 0.000000e+00 : f32
    %14 = vector.broadcast %cst_11 : f32 to vector<8x128xf32>
    %15 = arith.maximumf %13, %14 : vector<8x128xf32>
    %16 = arith.truncf %15 : vector<8x128xf32> to vector<8x128xbf16>
    %c0_12 = arith.constant 0 : index
    %c0_13 = arith.constant 0 : index
    %17 = vector.load %arg6[%c0_12, %c0_13] : memref<128x128xbf16, #tpu.memory_space<vmem>>, vector<128x128xbf16>
    %cst_14 = arith.constant dense<0.000000e+00> : vector<8x128xf32>
    %18 = tpu.matmul %16, %17, %cst_14 {dimension_numbers = #tpu.dot_dimension_numbers<[1], [0], [0], [1], [0, 0, 1, 1], [], []>} : vector<8x128xbf16>, vector<128x128xbf16>, vector<8x128xf32> -> vector<8x128xf32>
    %c0_15 = arith.constant 0 : index
    %c0_16 = arith.constant 0 : index
    %19 = vector.load %arg7[%c0_15, %c0_16] : memref<1x128xf32, #tpu.memory_space<vmem>>, vector<1x128xf32>
    %20 = vector.broadcast %19 : vector<1x128xf32> to vector<8x128xf32>
    %21 = arith.addf %18, %20 : vector<8x128xf32>
    %cst_17 = arith.constant 0.000000e+00 : f32
    %22 = vector.broadcast %cst_17 : f32 to vector<8x128xf32>
    %23 = arith.maximumf %21, %22 : vector<8x128xf32>
    %24 = arith.truncf %23 : vector<8x128xf32> to vector<8x128xbf16>
    %c0_18 = arith.constant 0 : index
    %c0_19 = arith.constant 0 : index
    %25 = vector.load %arg8[%c0_18, %c0_19] : memref<128x128xbf16, #tpu.memory_space<vmem>>, vector<128x128xbf16>
    %cst_20 = arith.constant dense<0.000000e+00> : vector<8x128xf32>
    %26 = tpu.matmul %24, %25, %cst_20 {dimension_numbers = #tpu.dot_dimension_numbers<[1], [0], [0], [1], [0, 0, 1, 1], [], []>} : vector<8x128xbf16>, vector<128x128xbf16>, vector<8x128xf32> -> vector<8x128xf32>
    %c0_21 = arith.constant 0 : index
    %c0_22 = arith.constant 0 : index
    %27 = vector.load %arg9[%c0_21, %c0_22] : memref<1x128xf32, #tpu.memory_space<vmem>>, vector<1x128xf32>
    %28 = vector.broadcast %27 : vector<1x128xf32> to vector<8x128xf32>
    %29 = arith.addf %26, %28 : vector<8x128xf32>
    %c0_23 = arith.constant 0 : index
    %c0_24 = arith.constant 0 : index
    %30 = vector.load %arg10[%c0_23, %c0_24] : memref<8x128xf32, #tpu.memory_space<vmem>>, vector<8x128xf32>
    tpu.vector_store %arg10[%c0_23, %c0_24], %29 {strides = array<i32>} : memref<8x128xf32, #tpu.memory_space<vmem>>, vector<8x128xf32>,
    return
  }
  func.func @transform_0(%arg0: i32) -> (i32, i32) {
    %c0_i32 = arith.constant 0 : i32
    %c0_i32_0 = arith.constant 0 : i32
    return %arg0, %c0_i32 : i32, i32
  }
  func.func @transform_1(%arg0: i32) -> (i32, i32) {
    %c0_i32 = arith.constant 0 : i32
    %c0_i32_0 = arith.constant 0 : i32
    %c0_i32_1 = arith.constant 0 : i32
    return %c0_i32, %c0_i32_0 : i32, i32
  }
  func.func @transform_2(%arg0: i32) -> (i32, i32) {
    %c0_i32 = arith.constant 0 : i32
    %c0_i32_0 = arith.constant 0 : i32
    %c0_i32_1 = arith.constant 0 : i32
    return %c0_i32, %c0_i32_0 : i32, i32
  }
  func.func @transform_3(%arg0: i32) -> (i32, i32) {
    %c0_i32 = arith.constant 0 : i32
    %c0_i32_0 = arith.constant 0 : i32
    %c0_i32_1 = arith.constant 0 : i32
    return %c0_i32, %c0_i32_0 : i32, i32
  }
  func.func @transform_4(%arg0: i32) -> (i32, i32) {
    %c0_i32 = arith.constant 0 : i32
    %c0_i32_0 = arith.constant 0 : i32
    %c0_i32_1 = arith.constant 0 : i32
    return %c0_i32, %c0_i32_0 : i32, i32
  }
  func.func @transform_5(%arg0: i32) -> (i32, i32) {
    %c0_i32 = arith.constant 0 : i32
    %c0_i32_0 = arith.constant 0 : i32
    %c0_i32_1 = arith.constant 0 : i32
    return %c0_i32, %c0_i32_0 : i32, i32
  }
  func.func @transform_6(%arg0: i32) -> (i32, i32) {
    %c0_i32 = arith.constant 0 : i32
    %c0_i32_0 = arith.constant 0 : i32
    %c0_i32_1 = arith.constant 0 : i32
    return %c0_i32, %c0_i32_0 : i32, i32
  }
  func.func @transform_7(%arg0: i32) -> (i32, i32) {
    %c0_i32 = arith.constant 0 : i32
    %c0_i32_0 = arith.constant 0 : i32
    %c0_i32_1 = arith.constant 0 : i32
    return %c0_i32, %c0_i32_0 : i32, i32
  }
  func.func @transform_8(%arg0: i32) -> (i32, i32) {
    %c0_i32 = arith.constant 0 : i32
    %c0_i32_0 = arith.constant 0 : i32
    %c0_i32_1 = arith.constant 0 : i32
    return %c0_i32, %c0_i32_0 : i32, i32
  }
  func.func @transform_9(%arg0: i32) -> (i32, i32) {
    %c0_i32 = arith.constant 0 : i32
    %c0_i32_0 = arith.constant 0 : i32
    return %arg0, %c0_i32 : i32, i32
  }
}

</mosaic_0001>

<llo_original>
// kernel: tpu_custom_call.1
$region0: #{tpu_custom_call.1}
  #allocation0 [shape = 'u32[]', space=smem, size = 0x4, offset = 0x4, fixed_abs, tag = 'smem constant byte address 0x4 - core index']
  #allocation1 [shape = 'u32[144,128]{1,0:T(1,128)}', space=vmem, size = 0x12000, scoped, tag = 'internal scratch']
  %s0 = inlined_call_operand.hbm [shape: bf16[8,1024], index: 0, kind: input, shape index: {}]
  %s1 = inlined_call_operand.hbm [shape: bf16[1024,128], index: 1, kind: input, shape index: {}]
  %s2 = inlined_call_operand.vmem [shape: f32[1,128], index: 2, kind: input, shape index: {}]
  %s3 = inlined_call_operand.hbm [shape: bf16[128,128], index: 3, kind: input, shape index: {}]
  %s4 = inlined_call_operand.vmem [shape: f32[1,128], index: 4, kind: input, shape index: {}]
  %s5 = inlined_call_operand.hbm [shape: bf16[128,128], index: 5, kind: input, shape index: {}]
  %s6 = inlined_call_operand.vmem [shape: f32[1,128], index: 6, kind: input, shape index: {}]
  %s7 = inlined_call_operand.hbm [shape: bf16[128,128], index: 7, kind: input, shape index: {}]
  %s8 = inlined_call_operand.vmem [shape: f32[1,128], index: 8, kind: input, shape index: {}]
  %s9 = inlined_call_operand.hbm [shape: f32[8,128], index: 9, kind: output, shape index: {}]
  %s10 = sld [smem:[#allocation0]]
  $region66: #{tpu_custom_call.1} parent=0
    _
  %s12 = ssub.s32 1, %s10
  %s13 = scalar_select 0, %s12, %s10
  $region1: #{tpu_custom_call.1} parent=0
    #allocation2 [shape = 'u8[16384]{0}', space=vmem, size = 0x4000, scoped, tag = 'input window, operand 0, single buffered']
    #allocation3 [shape = 's32[1]{0}', space=sflag, size = 0x4, scoped, tag = 'scoped memory for tpu_custom_call.1']
    #allocation4 [shape = 's32[1]{0}', space=sflag, size = 0x4, scoped, tag = 'scoped memory for tpu_custom_call.1']
    #allocation5 [shape = 'u8[262144]{0}', space=vmem, size = 0x40000, scoped, tag = 'input window, operand 1, single buffered']
    #allocation6 [shape = 's32[1]{0}', space=sflag, size = 0x4, scoped, tag = 'scoped memory for tpu_custom_call.1']
    #allocation7 [shape = 'u8[32768]{0}', space=vmem, size = 0x8000, scoped, tag = 'input window, operand 3, single buffered']
    #allocation8 [shape = 'u8[32768]{0}', space=vmem, size = 0x8000, scoped, tag = 'input window, operand 5, single buffered']
    #allocation9 [shape = 's32[1]{0}', space=sflag, size = 0x4, scoped, tag = 'scoped memory for tpu_custom_call.1']
    #allocation10 [shape = 'u8[32768]{0}', space=vmem, size = 0x8000, scoped, tag = 'input window, operand 7, single buffered']
    #allocation11 [shape = 'u8[4096]{0}', space=vmem, size = 0x1000, scoped, tag = 'output window, operand 0, single buffered']
    %14 = vsyncpa [#allocation3], 0
    %15 = vsyncpa [#allocation6], 0
    %16 = vsyncpa [#allocation9], 0
    %17 = vsyncpa [#allocation4], 0
    // Predicated region
    $region2: #{tpu_custom_call.1} parent=1 // pred_check
      _
    $region3: #{tpu_custom_call.1} parent=1 // pred_check_branch
      %19 = sbr.rel (0) target = $region5
    $region4: #{tpu_custom_call.1} parent=1 // pred_region
      %s21 = ssub.s32 512, 512
      %22 = vsyncadd [#allocation3], %s21
      %s24 = sshll.u32 [#allocation2], 4
      %s25 = int_to_ptr.vmem [resolvable:$true] %s24
      %27 = dma.hbm_to_vmem [thread:$0]  %s0, 512, %s25, [#allocation3]
    $region5: #{tpu_custom_call.1} parent=1 // pred_fallthru
      _
    // Predicated region
    $region6: #{tpu_custom_call.1} parent=1 // pred_check
      _
    $region7: #{tpu_custom_call.1} parent=1 // pred_check_branch
      %29 = sbr.rel (0) target = $region9
    $region8: #{tpu_custom_call.1} parent=1 // pred_region
      %s31 = ssub.s32 8192, 8192
      %32 = vsyncadd [#allocation6], %s31
      %s33 = sshll.u32 [#allocation5], 4
      %s34 = int_to_ptr.vmem [resolvable:$true] %s33
      %39 = dma.hbm_to_vmem [thread:$0]  %s1, 8192, %s34, [#allocation6], 64, 64, 4
    $region9: #{tpu_custom_call.1} parent=1 // pred_fallthru
      _
    // Predicated region
    $region10: #{tpu_custom_call.1} parent=1 // pred_check
      _
    $region11: #{tpu_custom_call.1} parent=1 // pred_check_branch
      %41 = sbr.rel (0) target = $region13
    $region12: #{tpu_custom_call.1} parent=1 // pred_region
      _
    $region13: #{tpu_custom_call.1} parent=1 // pred_fallthru
      _
    // Predicated region
    $region14: #{tpu_custom_call.1} parent=1 // pred_check
      _
    $region15: #{tpu_custom_call.1} parent=1 // pred_check_branch
      %43 = sbr.rel (0) target = $region17
    $region16: #{tpu_custom_call.1} parent=1 // pred_region
      %s45 = ssub.s32 1024, 1024
      %46 = vsyncadd [#allocation6], %s45
      %s47 = sshll.u32 [#allocation7], 4
      %s48 = int_to_ptr.vmem [resolvable:$true] %s47
      %53 = dma.hbm_to_vmem [thread:$0]  %s3, 1024, %s48, [#allocation6], 64, 64, 4
    $region17: #{tpu_custom_call.1} parent=1 // pred_fallthru
      _
    // Predicated region
    $region18: #{tpu_custom_call.1} parent=1 // pred_check
      _
    $region19: #{tpu_custom_call.1} parent=1 // pred_check_branch
      %55 = sbr.rel (0) target = $region21
    $region20: #{tpu_custom_call.1} parent=1 // pred_region
      _
    $region21: #{tpu_custom_call.1} parent=1 // pred_fallthru
      _
    // Predicated region
    $region22: #{tpu_custom_call.1} parent=1 // pred_check
      _
    $region23: #{tpu_custom_call.1} parent=1 // pred_check_branch
      %57 = sbr.rel (0) target = $region25
    $region24: #{tpu_custom_call.1} parent=1 // pred_region
      %s59 = ssub.s32 1024, 1024
      %60 = vsyncadd [#allocation9], %s59
      %s61 = sshll.u32 [#allocation8], 4
      %s62 = int_to_ptr.vmem [resolvable:$true] %s61
      %67 = dma.hbm_to_vmem [thread:$0]  %s5, 1024, %s62, [#allocation9], 64, 64, 4
    $region25: #{tpu_custom_call.1} parent=1 // pred_fallthru
      _
    // Predicated region
    $region26: #{tpu_custom_call.1} parent=1 // pred_check
      _
    $region27: #{tpu_custom_call.1} parent=1 // pred_check_branch
      %69 = sbr.rel (0) target = $region29
    $region28: #{tpu_custom_call.1} parent=1 // pred_region
      _
    $region29: #{tpu_custom_call.1} parent=1 // pred_fallthru
      _
    // Predicated region
    $region30: #{tpu_custom_call.1} parent=1 // pred_check
      _
    $region31: #{tpu_custom_call.1} parent=1 // pred_check_branch
      %71 = sbr.rel (0) target = $region33
    $region32: #{tpu_custom_call.1} parent=1 // pred_region
      %s73 = ssub.s32 1024, 1024
      %74 = vsyncadd [#allocation9], %s73
      %s75 = sshll.u32 [#allocation10], 4
      %s76 = int_to_ptr.vmem [resolvable:$true] %s75
      %81 = dma.hbm_to_vmem [thread:$0]  %s7, 1024, %s76, [#allocation9], 64, 64, 4
    $region33: #{tpu_custom_call.1} parent=1 // pred_fallthru
      _
    // Predicated region
    $region34: #{tpu_custom_call.1} parent=1 // pred_check
      _
    $region35: #{tpu_custom_call.1} parent=1 // pred_check_branch
      %83 = sbr.rel (0) target = $region37
    $region36: #{tpu_custom_call.1} parent=1 // pred_region
      _
    $region37: #{tpu_custom_call.1} parent=1 // pred_fallthru
      _
    // Predicated region
    $region38: #{tpu_custom_call.1} parent=1 // pred_check
      _
    $region39: #{tpu_custom_call.1} parent=1 // pred_check_branch
      %85 = sbr.rel (0) target = $region41
    $region40: #{tpu_custom_call.1} parent=1 // pred_region
      %86 = dma.done [#allocation3], 512
    $region41: #{tpu_custom_call.1} parent=1 // pred_fallthru
      _
    // Predicated region
    $region42: #{tpu_custom_call.1} parent=1 // pred_check
      _
    $region43: #{tpu_custom_call.1} parent=1 // pred_check_branch
      %88 = sbr.rel (0) target = $region45
    $region44: #{tpu_custom_call.1} parent=1 // pred_region
      %89 = dma.done [#allocation6], 8192
    $region45: #{tpu_custom_call.1} parent=1 // pred_fallthru
      _
    // Predicated region
    $region46: #{tpu_custom_call.1} parent=1 // pred_check
      _
    $region47: #{tpu_custom_call.1} parent=1 // pred_check_branch
      %91 = sbr.rel (0) target = $region49
    $region48: #{tpu_custom_call.1} parent=1 // pred_region
      %92 = dma.done [#allocation6], 1024
    $region49: #{tpu_custom_call.1} parent=1 // pred_fallthru
      _
    // Predicated region
    $region50: #{tpu_custom_call.1} parent=1 // pred_check
      _
    $region51: #{tpu_custom_call.1} parent=1 // pred_check_branch
      %94 = sbr.rel (0) target = $region53
    $region52: #{tpu_custom_call.1} parent=1 // pred_region
      %95 = dma.done [#allocation9], 1024
    $region53: #{tpu_custom_call.1} parent=1 // pred_fallthru
      _
    // Predicated region
    $region54: #{tpu_custom_call.1} parent=1 // pred_check
      _
    $region55: #{tpu_custom_call.1} parent=1 // pred_check_branch
      %97 = sbr.rel (0) target = $region57
    $region56: #{tpu_custom_call.1} parent=1 // pred_region
      %98 = dma.done [#allocation9], 1024
    $region57: #{tpu_custom_call.1} parent=1 // pred_fallthru
      _
    %v100 = vld [vmem:[#allocation2] sm:$0xff]
    %v101 = vld [vmem:[#allocation2 + $0x8] sm:$0xff]
    %v102 = vld [vmem:[#allocation2 + $0x10] sm:$0xff]
    %v103 = vld [vmem:[#allocation2 + $0x18] sm:$0xff]
    %v104 = vld [vmem:[#allocation5] sm:$0xf]
    %v105 = vld [vmem:[#allocation5 + $0x4] sm:$0xf]
    %v106 = vld [vmem:[#allocation5 + $0x8] sm:$0xf]
    %v107 = vld [vmem:[#allocation5 + $0xc] sm:$0xf]
    %v108 = vld [vmem:[#allocation5 + $0x10] sm:$0xf]
    %v109 = vld [vmem:[#allocation5 + $0x14] sm:$0xf]
    %v110 = vld [vmem:[#allocation5 + $0x18] sm:$0xf]
    %v111 = vld [vmem:[#allocation5 + $0x1c] sm:$0xf]
    %v112 = vld [vmem:[#allocation5 + $0x20] sm:$0xf]
    %v113 = vld [vmem:[#allocation5 + $0x24] sm:$0xf]
    %v114 = vld [vmem:[#allocation5 + $0x28] sm:$0xf]
    %v115 = vld [vmem:[#allocation5 + $0x2c] sm:$0xf]
    %v116 = vld [vmem:[#allocation5 + $0x30] sm:$0xf]
    %v117 = vld [vmem:[#allocation5 + $0x34] sm:$0xf]
    %v118 = vld [vmem:[#allocation5 + $0x38] sm:$0xf]
    %v119 = vld [vmem:[#allocation5 + $0x3c] sm:$0xf]
    %v120 = vld [vmem:[#allocation5 + $0x40] sm:$0xf]
    %v121 = vld [vmem:[#allocation5 + $0x44] sm:$0xf]
    %v122 = vld [vmem:[#allocation5 + $0x48] sm:$0xf]
    %v123 = vld [vmem:[#allocation5 + $0x4c] sm:$0xf]
    %v124 = vld [vmem:[#allocation5 + $0x50] sm:$0xf]
    %v125 = vld [vmem:[#allocation5 + $0x54] sm:$0xf]
    %v126 = vld [vmem:[#allocation5 + $0x58] sm:$0xf]
    %v127 = vld [vmem:[#allocation5 + $0x5c] sm:$0xf]
    %v128 = vld [vmem:[#allocation5 + $0x60] sm:$0xf]
    %v129 = vld [vmem:[#allocation5 + $0x64] sm:$0xf]
    %v130 = vld [vmem:[#allocation5 + $0x68] sm:$0xf]
    %v131 = vld [vmem:[#allocation5 + $0x6c] sm:$0xf]
    %v132 = vld [vmem:[#allocation5 + $0x70] sm:$0xf]
    %v133 = vld [vmem:[#allocation5 + $0x74] sm:$0xf]
    %v134 = vld [vmem:[#allocation5 + $0x78] sm:$0xf]
    %v135 = vld [vmem:[#allocation5 + $0x7c] sm:$0xf]
    %v136 = vld [vmem:[#allocation5 + $0x80] sm:$0xf]
    %v137 = vld [vmem:[#allocation5 + $0x84] sm:$0xf]
    %v138 = vld [vmem:[#allocation5 + $0x88] sm:$0xf]
    %v139 = vld [vmem:[#allocation5 + $0x8c] sm:$0xf]
    %v140 = vld [vmem:[#allocation5 + $0x90] sm:$0xf]
    %v141 = vld [vmem:[#allocation5 + $0x94] sm:$0xf]
    %v142 = vld [vmem:[#allocation5 + $0x98] sm:$0xf]
    %v143 = vld [vmem:[#allocation5 + $0x9c] sm:$0xf]
    %v144 = vld [vmem:[#allocation5 + $0xa0] sm:$0xf]
    %v145 = vld [vmem:[#allocation5 + $0xa4] sm:$0xf]
    %v146 = vld [vmem:[#allocation5 + $0xa8] sm:$0xf]
    %v147 = vld [vmem:[#allocation5 + $0xac] sm:$0xf]
    %v148 = vld [vmem:[#allocation5 + $0xb0] sm:$0xf]
    %v149 = vld [vmem:[#allocation5 + $0xb4] sm:$0xf]
    %v150 = vld [vmem:[#allocation5 + $0xb8] sm:$0xf]
    %v151 = vld [vmem:[#allocation5 + $0xbc] sm:$0xf]
    %v152 = vld [vmem:[#allocation5 + $0xc0] sm:$0xf]
    %v153 = vld [vmem:[#allocation5 + $0xc4] sm:$0xf]
    %v154 = vld [vmem:[#allocation5 + $0xc8] sm:$0xf]
    %v155 = vld [vmem:[#allocation5 + $0xcc] sm:$0xf]
    %v156 = vld [vmem:[#allocation5 + $0xd0] sm:$0xf]
    %v157 = vld [vmem:[#allocation5 + $0xd4] sm:$0xf]
    %v158 = vld [vmem:[#allocation5 + $0xd8] sm:$0xf]
    %v159 = vld [vmem:[#allocation5 + $0xdc] sm:$0xf]
    %v160 = vld [vmem:[#allocation5 + $0xe0] sm:$0xf]
    %v161 = vld [vmem:[#allocation5 + $0xe4] sm:$0xf]
    %v162 = vld [vmem:[#allocation5 + $0xe8] sm:$0xf]
    %v163 = vld [vmem:[#allocation5 + $0xec] sm:$0xf]
    %v164 = vld [vmem:[#allocation5 + $0xf0] sm:$0xf]
    %v165 = vld [vmem:[#allocation5 + $0xf4] sm:$0xf]
    %v166 = vld [vmem:[#allocation5 + $0xf8] sm:$0xf]
    %v167 = vld [vmem:[#allocation5 + $0xfc] sm:$0xf]
    %v168 = vld [vmem:[#allocation5 + $0x100] sm:$0xf]
    %v169 = vld [vmem:[#allocation5 + $0x104] sm:$0xf]
    %v170 = vld [vmem:[#allocation5 + $0x108] sm:$0xf]
    %v171 = vld [vmem:[#allocation5 + $0x10c] sm:$0xf]
    %v172 = vld [vmem:[#allocation5 + $0x110] sm:$0xf]
    %v173 = vld [vmem:[#allocation5 + $0x114] sm:$0xf]
    %v174 = vld [vmem:[#allocation5 + $0x118] sm:$0xf]
    %v175 = vld [vmem:[#allocation5 + $0x11c] sm:$0xf]
    %v176 = vld [vmem:[#allocation5 + $0x120] sm:$0xf]
    %v177 = vld [vmem:[#allocation5 + $0x124] sm:$0xf]
    %v178 = vld [vmem:[#allocation5 + $0x128] sm:$0xf]
    %v179 = vld [vmem:[#allocation5 + $0x12c] sm:$0xf]
    %v180 = vld [vmem:[#allocation5 + $0x130] sm:$0xf]
    %v181 = vld [vmem:[#allocation5 + $0x134] sm:$0xf]
    %v182 = vld [vmem:[#allocation5 + $0x138] sm:$0xf]
    %v183 = vld [vmem:[#allocation5 + $0x13c] sm:$0xf]
    %v184 = vld [vmem:[#allocation5 + $0x140] sm:$0xf]
    %v185 = vld [vmem:[#allocation5 + $0x144] sm:$0xf]
    %v186 = vld [vmem:[#allocation5 + $0x148] sm:$0xf]
    %v187 = vld [vmem:[#allocation5 + $0x14c] sm:$0xf]
    %v188 = vld [vmem:[#allocation5 + $0x150] sm:$0xf]
    %v189 = vld [vmem:[#allocation5 + $0x154] sm:$0xf]
    %v190 = vld [vmem:[#allocation5 + $0x158] sm:$0xf]
    %v191 = vld [vmem:[#allocation5 + $0x15c] sm:$0xf]
    %v192 = vld [vmem:[#allocation5 + $0x160] sm:$0xf]
    %v193 = vld [vmem:[#allocation5 + $0x164] sm:$0xf]
    %v194 = vld [vmem:[#allocation5 + $0x168] sm:$0xf]
    %v195 = vld [vmem:[#allocation5 + $0x16c] sm:$0xf]
    %v196 = vld [vmem:[#allocation5 + $0x170] sm:$0xf]
    %v197 = vld [vmem:[#allocation5 + $0x174] sm:$0xf]
    %v198 = vld [vmem:[#allocation5 + $0x178] sm:$0xf]
    %v199 = vld [vmem:[#allocation5 + $0x17c] sm:$0xf]
    %v200 = vld [vmem:[#allocation5 + $0x180] sm:$0xf]
    %v201 = vld [vmem:[#allocation5 + $0x184] sm:$0xf]
    %v202 = vld [vmem:[#allocation5 + $0x188] sm:$0xf]
    %v203 = vld [vmem:[#allocation5 + $0x18c] sm:$0xf]
    %v204 = vld [vmem:[#allocation5 + $0x190] sm:$0xf]
    %v205 = vld [vmem:[#allocation5 + $0x194] sm:$0xf]
    %v206 = vld [vmem:[#allocation5 + $0x198] sm:$0xf]
    %v207 = vld [vmem:[#allocation5 + $0x19c] sm:$0xf]
    %v208 = vld [vmem:[#allocation5 + $0x1a0] sm:$0xf]
    %v209 = vld [vmem:[#allocation5 + $0x1a4] sm:$0xf]
    %v210 = vld [vmem:[#allocation5 + $0x1a8] sm:$0xf]
    %v211 = vld [vmem:[#allocation5 + $0x1ac] sm:$0xf]
    %v212 = vld [vmem:[#allocation5 + $0x1b0] sm:$0xf]
    %v213 = vld [vmem:[#allocation5 + $0x1b4] sm:$0xf]
    %v214 = vld [vmem:[#allocation5 + $0x1b8] sm:$0xf]
    %v215 = vld [vmem:[#allocation5 + $0x1bc] sm:$0xf]
    %v216 = vld [vmem:[#allocation5 + $0x1c0] sm:$0xf]
    %v217 = vld [vmem:[#allocation5 + $0x1c4] sm:$0xf]
    %v218 = vld [vmem:[#allocation5 + $0x1c8] sm:$0xf]
    %v219 = vld [vmem:[#allocation5 + $0x1cc] sm:$0xf]
    %v220 = vld [vmem:[#allocation5 + $0x1d0] sm:$0xf]
    %v221 = vld [vmem:[#allocation5 + $0x1d4] sm:$0xf]
    %v222 = vld [vmem:[#allocation5 + $0x1d8] sm:$0xf]
    %v223 = vld [vmem:[#allocation5 + $0x1dc] sm:$0xf]
    %v224 = vld [vmem:[#allocation5 + $0x1e0] sm:$0xf]
    %v225 = vld [vmem:[#allocation5 + $0x1e4] sm:$0xf]
    %v226 = vld [vmem:[#allocation5 + $0x1e8] sm:$0xf]
    %v227 = vld [vmem:[#allocation5 + $0x1ec] sm:$0xf]
    %v228 = vld [vmem:[#allocation5 + $0x1f0] sm:$0xf]
    %v229 = vld [vmem:[#allocation5 + $0x1f4] sm:$0xf]
    %v230 = vld [vmem:[#allocation5 + $0x1f8] sm:$0xf]
    %v231 = vld [vmem:[#allocation5 + $0x1fc] sm:$0xf]
    %v232 = vld [vmem:[%s2] sm:$0x1]
    %v234 = vlaneseq
    %v235 = vshrl.u32 %v234, 7
    %v236 = vsub.s32 0, %v235
    %v237 = vrot.slane %v232, %v236
    %v243 = vunpack.c.l.b16 %v100
    %v244 = vunpack.c.h.b16 %v100
    %v245 = vunpack.c.l.b16 %v101
    %v246 = vunpack.c.h.b16 %v101
    %v247 = vunpack.c.l.b16 %v102
    %v248 = vunpack.c.h.b16 %v102
    %v249 = vunpack.c.l.b16 %v103
    %v250 = vunpack.c.h.b16 %v103
    %v251 = vpack.c.b16 %v243, %v243
    %v252 = vpack.c.b16 %v244, %v244
    %v253 = vpack.c.b16 %v245, %v245
    %v254 = vpack.c.b16 %v246, %v246
    %v255 = vpack.c.b16 %v247, %v247
    %v256 = vpack.c.b16 %v248, %v248
    %v257 = vpack.c.b16 %v249, %v249
    %v258 = vpack.c.b16 %v250, %v250
    %v395 = vunpack.c.l.b16 %v104
    %v396 = vunpack.c.l.b16 %v105
    %v397 = vunpack.c.l.b16 %v106
    %v398 = vunpack.c.l.b16 %v107
    %v399 = vunpack.c.l.b16 %v108
    %v400 = vunpack.c.l.b16 %v109
    %v401 = vunpack.c.l.b16 %v110
    %v402 = vunpack.c.l.b16 %v111
    %v403 = vunpack.c.l.b16 %v112
    %v404 = vunpack.c.l.b16 %v113
    %v405 = vunpack.c.l.b16 %v114
    %v406 = vunpack.c.l.b16 %v115
    %v407 = vunpack.c.l.b16 %v116
    %v408 = vunpack.c.l.b16 %v117
    %v409 = vunpack.c.l.b16 %v118
    %v410 = vunpack.c.l.b16 %v119
    %v411 = vunpack.c.l.b16 %v120
    %v412 = vunpack.c.l.b16 %v121
    %v413 = vunpack.c.l.b16 %v122
    %v414 = vunpack.c.l.b16 %v123
    %v415 = vunpack.c.l.b16 %v124
    %v416 = vunpack.c.l.b16 %v125
    %v417 = vunpack.c.l.b16 %v126
    %v418 = vunpack.c.l.b16 %v127
    %v419 = vunpack.c.l.b16 %v128
    %v420 = vunpack.c.l.b16 %v129
    %v421 = vunpack.c.l.b16 %v130
    %v422 = vunpack.c.l.b16 %v131
    %v423 = vunpack.c.l.b16 %v132
    %v424 = vunpack.c.l.b16 %v133
    %v425 = vunpack.c.l.b16 %v134
    %v426 = vunpack.c.l.b16 %v135
    %v427 = vunpack.c.l.b16 %v136
    %v428 = vunpack.c.l.b16 %v137
    %v429 = vunpack.c.l.b16 %v138
    %v430 = vunpack.c.l.b16 %v139
    %v431 = vunpack.c.l.b16 %v140
    %v432 = vunpack.c.l.b16 %v141
    %v433 = vunpack.c.l.b16 %v142
    %v434 = vunpack.c.l.b16 %v143
    %v435 = vunpack.c.l.b16 %v144
    %v436 = vunpack.c.l.b16 %v145
    %v437 = vunpack.c.l.b16 %v146
    %v438 = vunpack.c.l.b16 %v147
    %v439 = vunpack.c.l.b16 %v148
    %v440 = vunpack.c.l.b16 %v149
    %v441 = vunpack.c.l.b16 %v150
    %v442 = vunpack.c.l.b16 %v151
    %v443 = vunpack.c.l.b16 %v152
    %v444 = vunpack.c.l.b16 %v153
    %v445 = vunpack.c.l.b16 %v154
    %v446 = vunpack.c.l.b16 %v155
    %v447 = vunpack.c.l.b16 %v156
    %v448 = vunpack.c.l.b16 %v157
    %v449 = vunpack.c.l.b16 %v158
    %v450 = vunpack.c.l.b16 %v159
    %v451 = vunpack.c.l.b16 %v160
    %v452 = vunpack.c.l.b16 %v161
    %v453 = vunpack.c.l.b16 %v162
    %v454 = vunpack.c.l.b16 %v163
    %v455 = vunpack.c.l.b16 %v164
    %v456 = vunpack.c.l.b16 %v165
    %v457 = vunpack.c.l.b16 %v166
    %v458 = vunpack.c.l.b16 %v167
    %v459 = vunpack.c.l.b16 %v168
    %v460 = vunpack.c.l.b16 %v169
    %v461 = vunpack.c.l.b16 %v170
    %v462 = vunpack.c.l.b16 %v171
    %v463 = vunpack.c.l.b16 %v172
    %v464 = vunpack.c.l.b16 %v173
    %v465 = vunpack.c.l.b16 %v174
    %v466 = vunpack.c.l.b16 %v175
    %v467 = vunpack.c.l.b16 %v176
    %v468 = vunpack.c.l.b16 %v177
    %v469 = vunpack.c.l.b16 %v178
    %v470 = vunpack.c.l.b16 %v179
    %v471 = vunpack.c.l.b16 %v180
    %v472 = vunpack.c.l.b16 %v181
    %v473 = vunpack.c.l.b16 %v182
    %v474 = vunpack.c.l.b16 %v183
    %v475 = vunpack.c.l.b16 %v184
    %v476 = vunpack.c.l.b16 %v185
    %v477 = vunpack.c.l.b16 %v186
    %v478 = vunpack.c.l.b16 %v187
    %v479 = vunpack.c.l.b16 %v188
    %v480 = vunpack.c.l.b16 %v189
    %v481 = vunpack.c.l.b16 %v190
    %v482 = vunpack.c.l.b16 %v191
    %v483 = vunpack.c.l.b16 %v192
    %v484 = vunpack.c.l.b16 %v193
    %v485 = vunpack.c.l.b16 %v194
    %v486 = vunpack.c.l.b16 %v195
    %v487 = vunpack.c.l.b16 %v196
    %v488 = vunpack.c.l.b16 %v197
    %v489 = vunpack.c.l.b16 %v198
    %v490 = vunpack.c.l.b16 %v199
    %v491 = vunpack.c.l.b16 %v200
    %v492 = vunpack.c.l.b16 %v201
    %v493 = vunpack.c.l.b16 %v202
    %v494 = vunpack.c.l.b16 %v203
    %v495 = vunpack.c.l.b16 %v204
    %v496 = vunpack.c.l.b16 %v205
    %v497 = vunpack.c.l.b16 %v206
    %v498 = vunpack.c.l.b16 %v207
    %v499 = vunpack.c.l.b16 %v208
    %v500 = vunpack.c.l.b16 %v209
    %v501 = vunpack.c.l.b16 %v210
    %v502 = vunpack.c.l.b16 %v211
    %v503 = vunpack.c.l.b16 %v212
    %v504 = vunpack.c.l.b16 %v213
    %v505 = vunpack.c.l.b16 %v214
    %v506 = vunpack.c.l.b16 %v215
    %v507 = vunpack.c.l.b16 %v216
    %v508 = vunpack.c.l.b16 %v217
    %v509 = vunpack.c.l.b16 %v218
    %v510 = vunpack.c.l.b16 %v219
    %v511 = vunpack.c.l.b16 %v220
    %v512 = vunpack.c.l.b16 %v221
    %v513 = vunpack.c.l.b16 %v222
    %v514 = vunpack.c.l.b16 %v223
    %v515 = vunpack.c.l.b16 %v224
    %v516 = vunpack.c.l.b16 %v225
    %v517 = vunpack.c.l.b16 %v226
    %v518 = vunpack.c.l.b16 %v227
    %v519 = vunpack.c.l.b16 %v228
    %v520 = vunpack.c.l.b16 %v229
    %v521 = vunpack.c.l.b16 %v230
    %v522 = vunpack.c.l.b16 %v231
    %v523 = vpack.c.b16 %v396, %v395
    %v524 = vpack.c.b16 %v398, %v397
    %v525 = vpack.c.b16 %v400, %v399
    %v526 = vpack.c.b16 %v402, %v401
    %v527 = vpack.c.b16 %v404, %v403
    %v528 = vpack.c.b16 %v406, %v405
    %v529 = vpack.c.b16 %v408, %v407
    %v530 = vpack.c.b16 %v410, %v409
    %v531 = vpack.c.b16 %v412, %v411
    %v532 = vpack.c.b16 %v414, %v413
    %v533 = vpack.c.b16 %v416, %v415
    %v534 = vpack.c.b16 %v418, %v417
    %v535 = vpack.c.b16 %v420, %v419
    %v536 = vpack.c.b16 %v422, %v421
    %v537 = vpack.c.b16 %v424, %v423
    %v538 = vpack.c.b16 %v426, %v425
    %v539 = vpack.c.b16 %v428, %v427
    %v540 = vpack.c.b16 %v430, %v429
    %v541 = vpack.c.b16 %v432, %v431
    %v542 = vpack.c.b16 %v434, %v433
    %v543 = vpack.c.b16 %v436, %v435
    %v544 = vpack.c.b16 %v438, %v437
    %v545 = vpack.c.b16 %v440, %v439
    %v546 = vpack.c.b16 %v442, %v441
    %v547 = vpack.c.b16 %v444, %v443
    %v548 = vpack.c.b16 %v446, %v445
    %v549 = vpack.c.b16 %v448, %v447
    %v550 = vpack.c.b16 %v450, %v449
    %v551 = vpack.c.b16 %v452, %v451
    %v552 = vpack.c.b16 %v454, %v453
    %v553 = vpack.c.b16 %v456, %v455
    %v554 = vpack.c.b16 %v458, %v457
    %v555 = vpack.c.b16 %v460, %v459
    %v556 = vpack.c.b16 %v462, %v461
    %v557 = vpack.c.b16 %v464, %v463
    %v558 = vpack.c.b16 %v466, %v465
    %v559 = vpack.c.b16 %v468, %v467
    %v560 = vpack.c.b16 %v470, %v469
    %v561 = vpack.c.b16 %v472, %v471
    %v562 = vpack.c.b16 %v474, %v473
    %v563 = vpack.c.b16 %v476, %v475
    %v564 = vpack.c.b16 %v478, %v477
    %v565 = vpack.c.b16 %v480, %v479
    %v566 = vpack.c.b16 %v482, %v481
    %v567 = vpack.c.b16 %v484, %v483
    %v568 = vpack.c.b16 %v486, %v485
    %v569 = vpack.c.b16 %v488, %v487
    %v570 = vpack.c.b16 %v490, %v489
    %v571 = vpack.c.b16 %v492, %v491
    %v572 = vpack.c.b16 %v494, %v493
    %v573 = vpack.c.b16 %v496, %v495
    %v574 = vpack.c.b16 %v498, %v497
    %v575 = vpack.c.b16 %v500, %v499
    %v576 = vpack.c.b16 %v502, %v501
    %v577 = vpack.c.b16 %v504, %v503
    %v578 = vpack.c.b16 %v506, %v505
    %v579 = vpack.c.b16 %v508, %v507
    %v580 = vpack.c.b16 %v510, %v509
    %v581 = vpack.c.b16 %v512, %v511
    %v582 = vpack.c.b16 %v514, %v513
    %v583 = vpack.c.b16 %v516, %v515
    %v584 = vpack.c.b16 %v518, %v517
    %v585 = vpack.c.b16 %v520, %v519
    %v586 = vpack.c.b16 %v522, %v521
    %651 = vmatprep.subr.bf16.mxu0 0
    %652 = vmatpush1.bf16.msra.mxu0 %v523
    %653 = vmatprep.subr.bf16.mxu0 0
    %654 = vmatpush1.bf16.msra.mxu0 %v524
    %655 = vmatprep.subr.bf16.mxu0 0
    %656 = vmatpush1.bf16.msra.mxu0 %v525
    %657 = vmatprep.subr.bf16.mxu0 0
    %658 = vmatpush1.bf16.msra.mxu0 %v526
    %659 = vmatprep.subr.bf16.mxu0 0
    %660 = vmatpush1.bf16.msra.mxu0 %v527
    %661 = vmatprep.subr.bf16.mxu0 0
    %662 = vmatpush1.bf16.msra.mxu0 %v528
    %663 = vmatprep.subr.bf16.mxu0 0
    %664 = vmatpush1.bf16.msra.mxu0 %v529
    %665 = vmatprep.subr.bf16.mxu0 0
    %666 = vmatpush1.bf16.msra.mxu0 %v530
    %667 = vmatprep.subr.bf16.mxu0 0
    %668 = vmatpush1.bf16.msra.mxu0 %v531
    %669 = vmatprep.subr.bf16.mxu0 0
    %670 = vmatpush1.bf16.msra.mxu0 %v532
    %671 = vmatprep.subr.bf16.mxu0 0
    %672 = vmatpush1.bf16.msra.mxu0 %v533
    %673 = vmatprep.subr.bf16.mxu0 0
    %674 = vmatpush1.bf16.msra.mxu0 %v534
    %675 = vmatprep.subr.bf16.mxu0 0
    %676 = vmatpush1.bf16.msra.mxu0 %v535
    %677 = vmatprep.subr.bf16.mxu0 0
    %678 = vmatpush1.bf16.msra.mxu0 %v536
    %679 = vmatprep.subr.bf16.mxu0 0
    %680 = vmatpush1.bf16.msra.mxu0 %v537
    %681 = vmatprep.subr.bf16.mxu0 0
    %682 = vmatpush1.bf16.msra.mxu0 %v538
    %683 = vmatprep.mubr.bf16.mxu0 %v252
    %684 = vmatmul.mubr.bf16.gmra.mrb[0].mxu0 %v251
    %v685 = vpop.f32.mrb[0].mxu0
    %v686 = vadd.f32 %v237, %v685
    %v687 = vpop.f32.mrb[0].mxu0
    %v688 = vpop.f32.mrb[0].mxu0
    %v689 = vpop.f32.mrb[0].mxu0
    %690 = vdwg.mxu0
    %691 = vmatprep.subr.bf16.mxu0 0
    %692 = vmatpush1.bf16.msra.mxu0 %v539
    %693 = vmatprep.subr.bf16.mxu0 0
    %694 = vmatpush1.bf16.msra.mxu0 %v540
    %695 = vmatprep.subr.bf16.mxu0 0
    %696 = vmatpush1.bf16.msra.mxu0 %v541
    %697 = vmatprep.subr.bf16.mxu0 0
    %698 = vmatpush1.bf16.msra.mxu0 %v542
    %699 = vmatprep.subr.bf16.mxu0 0
    %700 = vmatpush1.bf16.msra.mxu0 %v543
    %701 = vmatprep.subr.bf16.mxu0 0
    %702 = vmatpush1.bf16.msra.mxu0 %v544
    %703 = vmatprep.subr.bf16.mxu0 0
    %704 = vmatpush1.bf16.msra.mxu0 %v545
    %705 = vmatprep.subr.bf16.mxu0 0
    %706 = vmatpush1.bf16.msra.mxu0 %v546
    %707 = vmatprep.subr.bf16.mxu0 0
    %708 = vmatpush1.bf16.msra.mxu0 %v547
    %709 = vmatprep.subr.bf16.mxu0 0
    %710 = vmatpush1.bf16.msra.mxu0 %v548
    %711 = vmatprep.subr.bf16.mxu0 0
    %712 = vmatpush1.bf16.msra.mxu0 %v549
    %713 = vmatprep.subr.bf16.mxu0 0
    %714 = vmatpush1.bf16.msra.mxu0 %v550
    %715 = vmatprep.subr.bf16.mxu0 0
    %716 = vmatpush1.bf16.msra.mxu0 %v551
    %717 = vmatprep.subr.bf16.mxu0 0
    %718 = vmatpush1.bf16.msra.mxu0 %v552
    %719 = vmatprep.subr.bf16.mxu0 0
    %720 = vmatpush1.bf16.msra.mxu0 %v553
    %721 = vmatprep.subr.bf16.mxu0 0
    %722 = vmatpush1.bf16.msra.mxu0 %v554
    %723 = vmatprep.mubr.bf16.mxu0 %v254
    %724 = vmatmul.mubr.bf16.gmra.mrb[0].mxu0 %v253
    %v725 = vpop.f32.mrb[0].mxu0
    %v726 = vadd.f32 %v686, %v725
    %v727 = vpop.f32.mrb[0].mxu0
    %v728 = vpop.f32.mrb[0].mxu0
    %v729 = vpop.f32.mrb[0].mxu0
    %730 = vdwg.mxu0
    %731 = vmatprep.subr.bf16.mxu0 0
    %732 = vmatpush1.bf16.msra.mxu0 %v555
    %733 = vmatprep.subr.bf16.mxu0 0
    %734 = vmatpush1.bf16.msra.mxu0 %v556
    %735 = vmatprep.subr.bf16.mxu0 0
    %736 = vmatpush1.bf16.msra.mxu0 %v557
    %737 = vmatprep.subr.bf16.mxu0 0
    %738 = vmatpush1.bf16.msra.mxu0 %v558
    %739 = vmatprep.subr.bf16.mxu0 0
    %740 = vmatpush1.bf16.msra.mxu0 %v559
    %741 = vmatprep.subr.bf16.mxu0 0
    %742 = vmatpush1.bf16.msra.mxu0 %v560
    %743 = vmatprep.subr.bf16.mxu0 0
    %744 = vmatpush1.bf16.msra.mxu0 %v561
    %745 = vmatprep.subr.bf16.mxu0 0
    %746 = vmatpush1.bf16.msra.mxu0 %v562
    %747 = vmatprep.subr.bf16.mxu0 0
    %748 = vmatpush1.bf16.msra.mxu0 %v563
    %749 = vmatprep.subr.bf16.mxu0 0
    %750 = vmatpush1.bf16.msra.mxu0 %v564
    %751 = vmatprep.subr.bf16.mxu0 0
    %752 = vmatpush1.bf16.msra.mxu0 %v565
    %753 = vmatprep.subr.bf16.mxu0 0
    %754 = vmatpush1.bf16.msra.mxu0 %v566
    %755 = vmatprep.subr.bf16.mxu0 0
    %756 = vmatpush1.bf16.msra.mxu0 %v567
    %757 = vmatprep.subr.bf16.mxu0 0
    %758 = vmatpush1.bf16.msra.mxu0 %v568
    %759 = vmatprep.subr.bf16.mxu0 0
    %760 = vmatpush1.bf16.msra.mxu0 %v569
    %761 = vmatprep.subr.bf16.mxu0 0
    %762 = vmatpush1.bf16.msra.mxu0 %v570
    %763 = vmatprep.mubr.bf16.mxu0 %v256
    %764 = vmatmul.mubr.bf16.gmra.mrb[0].mxu0 %v255
    %v765 = vpop.f32.mrb[0].mxu0
    %v766 = vadd.f32 %v726, %v765
    %v767 = vpop.f32.mrb[0].mxu0
    %v768 = vpop.f32.mrb[0].mxu0
    %v769 = vpop.f32.mrb[0].mxu0
    %770 = vdwg.mxu0
    %771 = vmatprep.subr.bf16.mxu0 0
    %772 = vmatpush1.bf16.msra.mxu0 %v571
    %773 = vmatprep.subr.bf16.mxu0 0
    %774 = vmatpush1.bf16.msra.mxu0 %v572
    %775 = vmatprep.subr.bf16.mxu0 0
    %776 = vmatpush1.bf16.msra.mxu0 %v573
    %777 = vmatprep.subr.bf16.mxu0 0
    %778 = vmatpush1.bf16.msra.mxu0 %v574
    %779 = vmatprep.subr.bf16.mxu0 0
    %780 = vmatpush1.bf16.msra.mxu0 %v575
    %781 = vmatprep.subr.bf16.mxu0 0
    %782 = vmatpush1.bf16.msra.mxu0 %v576
    %783 = vmatprep.subr.bf16.mxu0 0
    %784 = vmatpush1.bf16.msra.mxu0 %v577
    %785 = vmatprep.subr.bf16.mxu0 0
    %786 = vmatpush1.bf16.msra.mxu0 %v578
    %787 = vmatprep.subr.bf16.mxu0 0
    %788 = vmatpush1.bf16.msra.mxu0 %v579
    %789 = vmatprep.subr.bf16.mxu0 0
    %790 = vmatpush1.bf16.msra.mxu0 %v580
    %791 = vmatprep.subr.bf16.mxu0 0
    %792 = vmatpush1.bf16.msra.mxu0 %v581
    %793 = vmatprep.subr.bf16.mxu0 0
    %794 = vmatpush1.bf16.msra.mxu0 %v582
    %795 = vmatprep.subr.bf16.mxu0 0
    %796 = vmatpush1.bf16.msra.mxu0 %v583
    %797 = vmatprep.subr.bf16.mxu0 0
    %798 = vmatpush1.bf16.msra.mxu0 %v584
    %799 = vmatprep.subr.bf16.mxu0 0
    %800 = vmatpush1.bf16.msra.mxu0 %v585
    %801 = vmatprep.subr.bf16.mxu0 0
    %802 = vmatpush1.bf16.msra.mxu0 %v586
    %803 = vmatprep.mubr.bf16.mxu0 %v258
    %804 = vmatmul.mubr.bf16.gmra.mrb[0].mxu0 %v257
    %v805 = vpop.f32.mrb[0].mxu0
    %v806 = vadd.f32 %v766, %v805
    %v807 = vpop.f32.mrb[0].mxu0
    %v808 = vpop.f32.mrb[0].mxu0
    %v809 = vpop.f32.mrb[0].mxu0
    %810 = vdwg.mxu0
    %v811 = vmax.f32 %v806, 0.0
    %v812 = vpack.c.bf16 %v811, %v811
    %v813 = vld [vmem:[#allocation7] sm:$0xf]
    %v814 = vld [vmem:[#allocation7 + $0x4] sm:$0xf]
    %v815 = vld [vmem:[#allocation7 + $0x8] sm:$0xf]
    %v816 = vld [vmem:[#allocation7 + $0xc] sm:$0xf]
    %v817 = vld [vmem:[#allocation7 + $0x10] sm:$0xf]
    %v818 = vld [vmem:[#allocation7 + $0x14] sm:$0xf]
    %v819 = vld [vmem:[#allocation7 + $0x18] sm:$0xf]
    %v820 = vld [vmem:[#allocation7 + $0x1c] sm:$0xf]
    %v821 = vld [vmem:[#allocation7 + $0x20] sm:$0xf]
    %v822 = vld [vmem:[#allocation7 + $0x24] sm:$0xf]
    %v823 = vld [vmem:[#allocation7 + $0x28] sm:$0xf]
    %v824 = vld [vmem:[#allocation7 + $0x2c] sm:$0xf]
    %v825 = vld [vmem:[#allocation7 + $0x30] sm:$0xf]
    %v826 = vld [vmem:[#allocation7 + $0x34] sm:$0xf]
    %v827 = vld [vmem:[#allocation7 + $0x38] sm:$0xf]
    %v828 = vld [vmem:[#allocation7 + $0x3c] sm:$0xf]
    %v829 = vld [vmem:[%s4] sm:$0x1]
    %v831 = vlaneseq
    %v832 = vshrl.u32 %v831, 7
    %v833 = vsub.s32 0, %v832
    %v834 = vrot.slane %v829, %v833
    %v852 = vunpack.c.l.b16 %v813
    %v853 = vunpack.c.l.b16 %v814
    %v854 = vunpack.c.l.b16 %v815
    %v855 = vunpack.c.l.b16 %v816
    %v856 = vunpack.c.l.b16 %v817
    %v857 = vunpack.c.l.b16 %v818
    %v858 = vunpack.c.l.b16 %v819
    %v859 = vunpack.c.l.b16 %v820
    %v860 = vunpack.c.l.b16 %v821
    %v861 = vunpack.c.l.b16 %v822
    %v862 = vunpack.c.l.b16 %v823
    %v863 = vunpack.c.l.b16 %v824
    %v864 = vunpack.c.l.b16 %v825
    %v865 = vunpack.c.l.b16 %v826
    %v866 = vunpack.c.l.b16 %v827
    %v867 = vunpack.c.l.b16 %v828
    %v868 = vpack.c.b16 %v853, %v852
    %v869 = vpack.c.b16 %v855, %v854
    %v870 = vpack.c.b16 %v857, %v856
    %v871 = vpack.c.b16 %v859, %v858
    %v872 = vpack.c.b16 %v861, %v860
    %v873 = vpack.c.b16 %v863, %v862
    %v874 = vpack.c.b16 %v865, %v864
    %v875 = vpack.c.b16 %v867, %v866
    %884 = vmatprep.subr.bf16.mxu0 0
    %885 = vmatpush1.bf16.msra.mxu0 %v868
    %886 = vmatprep.subr.bf16.mxu0 0
    %887 = vmatpush1.bf16.msra.mxu0 %v869
    %888 = vmatprep.subr.bf16.mxu0 0
    %889 = vmatpush1.bf16.msra.mxu0 %v870
    %890 = vmatprep.subr.bf16.mxu0 0
    %891 = vmatpush1.bf16.msra.mxu0 %v871
    %892 = vmatprep.subr.bf16.mxu0 0
    %893 = vmatpush1.bf16.msra.mxu0 %v872
    %894 = vmatprep.subr.bf16.mxu0 0
    %895 = vmatpush1.bf16.msra.mxu0 %v873
    %896 = vmatprep.subr.bf16.mxu0 0
    %897 = vmatpush1.bf16.msra.mxu0 %v874
    %898 = vmatprep.subr.bf16.mxu0 0
    %899 = vmatpush1.bf16.msra.mxu0 %v875
    %900 = vmatprep.subr.bf16.mxu0 0
    %901 = vmatpush1.bf16.msra.mxu0 0
    %902 = vmatprep.subr.bf16.mxu0 0
    %903 = vmatpush1.bf16.msra.mxu0 0
    %904 = vmatprep.subr.bf16.mxu0 0
    %905 = vmatpush1.bf16.msra.mxu0 0
    %906 = vmatprep.subr.bf16.mxu0 0
    %907 = vmatpush1.bf16.msra.mxu0 0
    %908 = vmatprep.subr.bf16.mxu0 0
    %909 = vmatpush1.bf16.msra.mxu0 0
    %910 = vmatprep.subr.bf16.mxu0 0
    %911 = vmatpush1.bf16.msra.mxu0 0
    %912 = vmatprep.subr.bf16.mxu0 0
    %913 = vmatpush1.bf16.msra.mxu0 0
    %914 = vmatprep.subr.bf16.mxu0 0
    %915 = vmatpush1.bf16.msra.mxu0 0
    %916 = vmatprep.mubr.bf16.mxu0 0
    %917 = vmatmul.mubr.bf16.gmra.mrb[0].mxu0 %v812
    %v918 = vpop.f32.mrb[0].mxu0
    %v919 = vadd.f32 %v834, %v918
    %v920 = vpop.f32.mrb[0].mxu0
    %v921 = vpop.f32.mrb[0].mxu0
    %v922 = vpop.f32.mrb[0].mxu0
    %923 = vdwg.mxu0
    %v924 = vmax.f32 %v919, 0.0
    %v925 = vpack.c.bf16 %v924, %v924
    %v926 = vld [vmem:[#allocation8] sm:$0xf]
    %v927 = vld [vmem:[#allocation8 + $0x4] sm:$0xf]
    %v928 = vld [vmem:[#allocation8 + $0x8] sm:$0xf]
    %v929 = vld [vmem:[#allocation8 + $0xc] sm:$0xf]
    %v930 = vld [vmem:[#allocation8 + $0x10] sm:$0xf]
    %v931 = vld [vmem:[#allocation8 + $0x14] sm:$0xf]
    %v932 = vld [vmem:[#allocation8 + $0x18] sm:$0xf]
    %v933 = vld [vmem:[#allocation8 + $0x1c] sm:$0xf]
    %v934 = vld [vmem:[#allocation8 + $0x20] sm:$0xf]
    %v935 = vld [vmem:[#allocation8 + $0x24] sm:$0xf]
    %v936 = vld [vmem:[#allocation8 + $0x28] sm:$0xf]
    %v937 = vld [vmem:[#allocation8 + $0x2c] sm:$0xf]
    %v938 = vld [vmem:[#allocation8 + $0x30] sm:$0xf]
    %v939 = vld [vmem:[#allocation8 + $0x34] sm:$0xf]
    %v940 = vld [vmem:[#allocation8 + $0x38] sm:$0xf]
    %v941 = vld [vmem:[#allocation8 + $0x3c] sm:$0xf]
    %v942 = vld [vmem:[%s6] sm:$0x1]
    %v944 = vlaneseq
    %v945 = vshrl.u32 %v944, 7
    %v946 = vsub.s32 0, %v945
    %v947 = vrot.slane %v942, %v946
    %v965 = vunpack.c.l.b16 %v926
    %v966 = vunpack.c.l.b16 %v927
    %v967 = vunpack.c.l.b16 %v928
    %v968 = vunpack.c.l.b16 %v929
    %v969 = vunpack.c.l.b16 %v930
    %v970 = vunpack.c.l.b16 %v931
    %v971 = vunpack.c.l.b16 %v932
    %v972 = vunpack.c.l.b16 %v933
    %v973 = vunpack.c.l.b16 %v934
    %v974 = vunpack.c.l.b16 %v935
    %v975 = vunpack.c.l.b16 %v936
    %v976 = vunpack.c.l.b16 %v937
    %v977 = vunpack.c.l.b16 %v938
    %v978 = vunpack.c.l.b16 %v939
    %v979 = vunpack.c.l.b16 %v940
    %v980 = vunpack.c.l.b16 %v941
    %v981 = vpack.c.b16 %v966, %v965
    %v982 = vpack.c.b16 %v968, %v967
    %v983 = vpack.c.b16 %v970, %v969
    %v984 = vpack.c.b16 %v972, %v971
    %v985 = vpack.c.b16 %v974, %v973
    %v986 = vpack.c.b16 %v976, %v975
    %v987 = vpack.c.b16 %v978, %v977
    %v988 = vpack.c.b16 %v980, %v979
    %997 = vmatprep.subr.bf16.mxu0 0
    %998 = vmatpush1.bf16.msra.mxu0 %v981
    %999 = vmatprep.subr.bf16.mxu0 0
    %1000 = vmatpush1.bf16.msra.mxu0 %v982
    %1001 = vmatprep.subr.bf16.mxu0 0
    %1002 = vmatpush1.bf16.msra.mxu0 %v983
    %1003 = vmatprep.subr.bf16.mxu0 0
    %1004 = vmatpush1.bf16.msra.mxu0 %v984
    %1005 = vmatprep.subr.bf16.mxu0 0
    %1006 = vmatpush1.bf16.msra.mxu0 %v985
    %1007 = vmatprep.subr.bf16.mxu0 0
    %1008 = vmatpush1.bf16.msra.mxu0 %v986
    %1009 = vmatprep.subr.bf16.mxu0 0
    %1010 = vmatpush1.bf16.msra.mxu0 %v987
    %1011 = vmatprep.subr.bf16.mxu0 0
    %1012 = vmatpush1.bf16.msra.mxu0 %v988
    %1013 = vmatprep.subr.bf16.mxu0 0
    %1014 = vmatpush1.bf16.msra.mxu0 0
    %1015 = vmatprep.subr.bf16.mxu0 0
    %1016 = vmatpush1.bf16.msra.mxu0 0
    %1017 = vmatprep.subr.bf16.mxu0 0
    %1018 = vmatpush1.bf16.msra.mxu0 0
    %1019 = vmatprep.subr.bf16.mxu0 0
    %1020 = vmatpush1.bf16.msra.mxu0 0
    %1021 = vmatprep.subr.bf16.mxu0 0
    %1022 = vmatpush1.bf16.msra.mxu0 0
    %1023 = vmatprep.subr.bf16.mxu0 0
    %1024 = vmatpush1.bf16.msra.mxu0 0
    %1025 = vmatprep.subr.bf16.mxu0 0
    %1026 = vmatpush1.bf16.msra.mxu0 0
    %1027 = vmatprep.subr.bf16.mxu0 0
    %1028 = vmatpush1.bf16.msra.mxu0 0
    %1029 = vmatprep.mubr.bf16.mxu0 0
    %1030 = vmatmul.mubr.bf16.gmra.mrb[0].mxu0 %v925
    %v1031 = vpop.f32.mrb[0].mxu0
    %v1032 = vadd.f32 %v947, %v1031
    %v1033 = vpop.f32.mrb[0].mxu0
    %v1034 = vpop.f32.mrb[0].mxu0
    %v1035 = vpop.f32.mrb[0].mxu0
    %1036 = vdwg.mxu0
    %v1037 = vmax.f32 %v1032, 0.0
    %v1038 = vpack.c.bf16 %v1037, %v1037
    %v1039 = vld [vmem:[#allocation10] sm:$0xf]
    %v1040 = vld [vmem:[#allocation10 + $0x4] sm:$0xf]
    %v1041 = vld [vmem:[#allocation10 + $0x8] sm:$0xf]
    %v1042 = vld [vmem:[#allocation10 + $0xc] sm:$0xf]
    %v1043 = vld [vmem:[#allocation10 + $0x10] sm:$0xf]
    %v1044 = vld [vmem:[#allocation10 + $0x14] sm:$0xf]
    %v1045 = vld [vmem:[#allocation10 + $0x18] sm:$0xf]
    %v1046 = vld [vmem:[#allocation10 + $0x1c] sm:$0xf]
    %v1047 = vld [vmem:[#allocation10 + $0x20] sm:$0xf]
    %v1048 = vld [vmem:[#allocation10 + $0x24] sm:$0xf]
    %v1049 = vld [vmem:[#allocation10 + $0x28] sm:$0xf]
    %v1050 = vld [vmem:[#allocation10 + $0x2c] sm:$0xf]
    %v1051 = vld [vmem:[#allocation10 + $0x30] sm:$0xf]
    %v1052 = vld [vmem:[#allocation10 + $0x34] sm:$0xf]
    %v1053 = vld [vmem:[#allocation10 + $0x38] sm:$0xf]
    %v1054 = vld [vmem:[#allocation10 + $0x3c] sm:$0xf]
    %v1055 = vld [vmem:[%s8] sm:$0x1]
    %v1057 = vlaneseq
    %v1058 = vshrl.u32 %v1057, 7
    %v1059 = vsub.s32 0, %v1058
    %v1060 = vrot.slane %v1055, %v1059
    %v1078 = vunpack.c.l.b16 %v1039
    %v1079 = vunpack.c.l.b16 %v1040
    %v1080 = vunpack.c.l.b16 %v1041
    %v1081 = vunpack.c.l.b16 %v1042
    %v1082 = vunpack.c.l.b16 %v1043
    %v1083 = vunpack.c.l.b16 %v1044
    %v1084 = vunpack.c.l.b16 %v1045
    %v1085 = vunpack.c.l.b16 %v1046
    %v1086 = vunpack.c.l.b16 %v1047
    %v1087 = vunpack.c.l.b16 %v1048
    %v1088 = vunpack.c.l.b16 %v1049
    %v1089 = vunpack.c.l.b16 %v1050
    %v1090 = vunpack.c.l.b16 %v1051
    %v1091 = vunpack.c.l.b16 %v1052
    %v1092 = vunpack.c.l.b16 %v1053
    %v1093 = vunpack.c.l.b16 %v1054
    %v1094 = vpack.c.b16 %v1079, %v1078
    %v1095 = vpack.c.b16 %v1081, %v1080
    %v1096 = vpack.c.b16 %v1083, %v1082
    %v1097 = vpack.c.b16 %v1085, %v1084
    %v1098 = vpack.c.b16 %v1087, %v1086
    %v1099 = vpack.c.b16 %v1089, %v1088
    %v1100 = vpack.c.b16 %v1091, %v1090
    %v1101 = vpack.c.b16 %v1093, %v1092
    %1110 = vmatprep.subr.bf16.mxu0 0
    %1111 = vmatpush1.bf16.msra.mxu0 %v1094
    %1112 = vmatprep.subr.bf16.mxu0 0
    %1113 = vmatpush1.bf16.msra.mxu0 %v1095
    %1114 = vmatprep.subr.bf16.mxu0 0
    %1115 = vmatpush1.bf16.msra.mxu0 %v1096
    %1116 = vmatprep.subr.bf16.mxu0 0
    %1117 = vmatpush1.bf16.msra.mxu0 %v1097
    %1118 = vmatprep.subr.bf16.mxu0 0
    %1119 = vmatpush1.bf16.msra.mxu0 %v1098
    %1120 = vmatprep.subr.bf16.mxu0 0
    %1121 = vmatpush1.bf16.msra.mxu0 %v1099
    %1122 = vmatprep.subr.bf16.mxu0 0
    %1123 = vmatpush1.bf16.msra.mxu0 %v1100
    %1124 = vmatprep.subr.bf16.mxu0 0
    %1125 = vmatpush1.bf16.msra.mxu0 %v1101
    %1126 = vmatprep.subr.bf16.mxu0 0
    %1127 = vmatpush1.bf16.msra.mxu0 0
    %1128 = vmatprep.subr.bf16.mxu0 0
    %1129 = vmatpush1.bf16.msra.mxu0 0
    %1130 = vmatprep.subr.bf16.mxu0 0
    %1131 = vmatpush1.bf16.msra.mxu0 0
    %1132 = vmatprep.subr.bf16.mxu0 0
    %1133 = vmatpush1.bf16.msra.mxu0 0
    %1134 = vmatprep.subr.bf16.mxu0 0
    %1135 = vmatpush1.bf16.msra.mxu0 0
    %1136 = vmatprep.subr.bf16.mxu0 0
    %1137 = vmatpush1.bf16.msra.mxu0 0
    %1138 = vmatprep.subr.bf16.mxu0 0
    %1139 = vmatpush1.bf16.msra.mxu0 0
    %1140 = vmatprep.subr.bf16.mxu0 0
    %1141 = vmatpush1.bf16.msra.mxu0 0
    %1142 = vmatprep.mubr.bf16.mxu0 0
    %1143 = vmatmul.mubr.bf16.gmra.mrb[0].mxu0 %v1038
    %v1144 = vpop.f32.mrb[0].mxu0
    %v1145 = vadd.f32 %v1060, %v1144
    %v1146 = vpop.f32.mrb[0].mxu0
    %v1147 = vpop.f32.mrb[0].mxu0
    %v1148 = vpop.f32.mrb[0].mxu0
    %1149 = vdwg.mxu0
    %1150 = vst [vmem:[#allocation11] sm:$0xff] %v1145
    // Predicated region
    $region58: #{tpu_custom_call.1} parent=1 // pred_check
      _
    $region59: #{tpu_custom_call.1} parent=1 // pred_check_branch
      %1152 = sbr.rel (0) target = $region61
    $region60: #{tpu_custom_call.1} parent=1 // pred_region
      %s1154 = ssub.s32 128, 128
      %1155 = vsyncadd [#allocation4], %s1154
      %s1157 = sshll.u32 [#allocation11], 4
      %s1158 = int_to_ptr.vmem [resolvable:$true] %s1157
      %1160 = dma.vmem_to_hbm [thread:$0]  %s1158, 128, %s9, [#allocation4]
    $region61: #{tpu_custom_call.1} parent=1 // pred_fallthru
      _
    // Predicated region
    $region62: #{tpu_custom_call.1} parent=1 // pred_check
      _
    $region63: #{tpu_custom_call.1} parent=1 // pred_check_branch
      %1162 = sbr.rel (0) target = $region65
    $region64: #{tpu_custom_call.1} parent=1 // pred_region
      %1163 = dma.done [#allocation4], 128
    $region65: #{tpu_custom_call.1} parent=1 // pred_fallthru
      _
    %1164 = vsyncpa [#allocation3], 1
    %1165 = vsyncpa [#allocation6], 1
    %1166 = vsyncpa [#allocation9], 1
    %1167 = vsyncpa [#allocation4], 1

</llo_original>
